<compile_context>
chip_gen: v5e
topology: v5e:2x2
jax: 0.10.0
libtpu: 0.0.40
codegen_flags: <defaults>
</compile_context>

<pallas_src>
import jax
import jax.numpy as jnp
from jax.experimental import pallas as pl
from jax.experimental.pallas import tpu as pltpu


def _hbm_copy_kernel(x_hbm_ref, o_hbm_ref, sem):
    # The whole forward pass is identity -> one HBM->HBM DMA.  No VMEM staging, no vregs.
    copy = pltpu.make_async_copy(x_hbm_ref, o_hbm_ref, sem)
    copy.start()
    copy.wait()


def _hbm_identity_copy(x: jax.Array) -> jax.Array:
    """Bit-exact copy of `x` via a single DMA descriptor (any shape / dtype)."""
    return pl.pallas_call(
        _hbm_copy_kernel,
        out_shape=jax.ShapeDtypeStruct(x.shape, x.dtype),
        in_specs=[pl.BlockSpec(memory_space=pl.ANY)],
        out_specs=pl.BlockSpec(memory_space=pl.ANY),
        scratch_shapes=[pltpu.SemaphoreType.DMA],
        compiler_params=pltpu.CompilerParams(has_side_effects=True),
    )(x)


def my_embedder_forward(batch: jax.Array, force_kernel: bool = False) -> jax.Array:
    """Pallas implementation of MyEmbedder.forward: identity on `batch`.

    The PyTorch module only moves the tensor to the target device; under JAX the array already
    lives on the default TPU device, so the cheapest correct implementation on every TPU
    generation is to return it untouched (zero HBM bytes moved).  `force_kernel=True` routes
    through a Pallas HBM->HBM DMA copy purely for API-parity / kernel-path testing.
    """
    if not force_kernel:
        return batch
    return _hbm_identity_copy(batch)


if __name__ == "__main__":
    # MyEmbedder.__init__ creates no parameters, so there is nothing to initialize.
    key = jax.random.PRNGKey(0)

    # Small inputs consistent with the module (a token-id batch and a float feature batch).
    x_int = jax.random.randint(key, (2, 8), 0, 128, dtype=jnp.int32)
    x_flt = jax.random.normal(jax.random.fold_in(key, 1), (2, 4, 16, 16), dtype=jnp.float32)

    # Default path: pure identity, no kernel launched.
    y_int = jax.block_until_ready(my_embedder_forward(x_int))
    y_flt = jax.block_until_ready(my_embedder_forward(x_flt))

    # Forced kernel path: exercise the HBM->HBM DMA copy on both dtypes / shapes (no reshape).
    y_int_k = jax.block_until_ready(my_embedder_forward(x_int, force_kernel=True))
    y_flt_k = jax.block_until_ready(my_embedder_forward(x_flt, force_kernel=True))

    assert y_int.shape == x_int.shape and y_int.dtype == x_int.dtype
    assert y_flt.shape == x_flt.shape and y_flt.dtype == x_flt.dtype
    assert y_int_k.shape == x_int.shape and y_int_k.dtype == x_int.dtype
    assert y_flt_k.shape == x_flt.shape and y_flt_k.dtype == x_flt.dtype
    assert bool(jnp.all(y_int == x_int))
    assert bool(jnp.all(y_flt == x_flt))
    assert bool(jnp.all(y_int_k == x_int))
    assert bool(jnp.all(y_flt_k == x_flt))

    print("KERNEL_OK")
</pallas_src>

<mosaic_0001>
module attributes {stable_mosaic.version = 11 : i64} {
  func.func @_hbm_copy_kernel(%arg0: memref<2x8xi32, #tpu.memory_space<any>>, %arg1: memref<2x8xi32, #tpu.memory_space<any>>, %arg2: memref<!tpu.dma_semaphore, #tpu.memory_space<semaphore_mem>>) attributes {dimension_semantics = [], scalar_prefetch = 0 : i64, scratch_operands = 1 : i64, tpu.core_type = #tpu.core_type<tc>} {
    tpu.enqueue_dma source(%arg0 : memref<2x8xi32, #tpu.memory_space<any>>) target(%arg1 : memref<2x8xi32, #tpu.memory_space<any>>) target_semaphore(%arg2 : memref<!tpu.dma_semaphore, #tpu.memory_space<semaphore_mem>>)
    tpu.wait_dma2 semaphore(%arg2 : memref<!tpu.dma_semaphore, #tpu.memory_space<semaphore_mem>>) src(%arg0 : memref<2x8xi32, #tpu.memory_space<any>>) dst(%arg1 : memref<2x8xi32, #tpu.memory_space<any>>)
    return
  }
}

</mosaic_0001>

<llo_original>
// kernel: tpu_custom_call.1
$region0: #{tpu_custom_call.1}
  #allocation0 [shape = 'u32[]', space=smem, size = 0x4, offset = 0x4, fixed_abs, tag = 'smem constant byte address 0x4 - core index']
  #allocation1 [shape = 'u32[72,128]{1,0:T(1,128)}', space=vmem, size = 0x9000, scoped, tag = 'internal scratch']
  #allocation2 [shape = 's32[1]{0}', space=sflag, size = 0x4, scoped, tag = 'scratch operand']
  #allocation3 [shape = 's32[]', space=sflag, size = 0x4, offset = 0, fixed_abs, tag = 'sflag constant byte address 0x0 - dummy sync flag']
  #allocation4 [shape = 'u32[0]{0}', space=smem, size = 0, offset = 0, fixed_abs, tag = 'smem constant byte address 0x0 - null']
  %s0 = inlined_call_operand.hbm [shape: s32[2,8], index: 0, kind: input, shape index: {}]
  %s1 = inlined_call_operand.hbm [shape: s32[2,8], index: 1, kind: output, shape index: {}]
  %s2 = sld [smem:[#allocation0]]
  $region2: #{tpu_custom_call.1} parent=0
    _
  %s4 = ssub.s32 1, %s2
  %s5 = scalar_select 0, %s4, %s2
  %s7 = sshll.u32 1, 14
  %s8 = sxor.u32 4294967295, %s7
  %s10 = sshll.u32 %s0, 4
  %s11 = int_to_ptr.hbm [resolvable:$true] %s10
  %s12 = sshll.u32 %s1, 4
  %s13 = int_to_ptr.hbm [resolvable:$true] %s12
  %16 = dma.general %s11, 32, %s13, [#allocation2], [#allocation3], [#allocation4], 0, 0
  %s17 = smul.u32 2, 1
  %s18 = sshll.u32 %s17, 4
  %19 = dma.done [#allocation2], %s18
  %20 = vsyncmov [#allocation2]
  %s21 = vpop.sfrf %20
  %p22 = scmp.eq.s32.totalorder %s21, 0
  %p23 = pneg %p22
  %25 = shalt.err (%p23)

</llo_original>
